<compile_context>
chip_gen: v6e
topology: v6e:2x2x1
jax: 0.10.0
libtpu: 0.0.40
codegen_flags: <defaults>
</compile_context>

<pallas_src>
import functools
import numpy as np

import jax
import jax.numpy as jnp
from jax import lax
from jax.experimental import pallas as pl
from jax.experimental.pallas import tpu as pltpu

EPS = 1e-5                      # MaskedNorm eps
VMEM_LIMIT = 64 * 1024 * 1024   # explicit scoped-VMEM budget (safe on v5e/v6e/v7x)


def _round_up(x, m):
    return (x + m - 1) // m * m


def _pick_node_tile(N, K, target_edge_rows=8192, onehot_budget_bytes=8 << 20):
    """Node-row tile: ~target_edge_rows edge rows per grid step, capped so the
    in-kernel one-hot gather matrix (tile*K, N) f32 stays within budget."""
    target = max(8, (target_edge_rows // K) // 8 * 8)
    cap = max(8, (onehot_budget_bytes // (4 * K * max(N, 1))) // 8 * 8)
    return int(min(_round_up(N, 8), target, cap))


# ----------------------------------------------------------------------------
# Kernel 1: "transformer" MaskedNorm on nodes (LN + affine + node mask).
# Output lives in HBM so the update kernels can keep the whole per-batch
# normalized table resident in VMEM for the fused gather.
# ----------------------------------------------------------------------------
def _node_norm_kernel(x_ref, m_ref, w_ref, b_ref, o_ref):
    x = x_ref[...]
    mu = jnp.mean(x, axis=-1, keepdims=True)
    var = jnp.mean(x * x, axis=-1, keepdims=True) - mu * mu      # one-pass
    o_ref[...] = ((x - mu) * lax.rsqrt(var + EPS) * w_ref[...] + b_ref[...]) * m_ref[...]


# ----------------------------------------------------------------------------
# Kernel 2: node update.
#   messages = MLP([node_i, node_j, edge_norm])   (flattened over neighbors)
#   message  = sum_k mask_ij * messages / scale   (K-sum moved before W2)
#   node_out = (node_h + MLP([node_h_norm, message])) * mask_i
# node_j comes from an in-VMEM one-hot gather against the resident node table.
# ----------------------------------------------------------------------------
def _node_update_kernel(tbl_ref, nhn_ref, nh_ref, eh_ref, idx_ref, mi_ref, mij_ref,
                        ew_ref, eb_ref,
                        wi_ref, wje_ref, b1_ref, w2_ref, b2_ref,
                        u1_ref, c1_ref, u2_ref, c2_ref,
                        o_ref, *, K, scale):
    TE, De = eh_ref.shape
    T = TE // K
    N, Dn = tbl_ref.shape
    Hm = wi_ref.shape[1]

    # fused edge layer-norm (single pass, EUP rsqrt) + edge mask (never in HBM)
    e = eh_ref[...]                                               # (TE, De)
    mu = jnp.mean(e, axis=-1, keepdims=True)
    var = jnp.mean(e * e, axis=-1, keepdims=True) - mu * mu
    mij = mij_ref[...]                                            # (TE, 1)
    en = ((e - mu) * lax.rsqrt(var + EPS) * ew_ref[...] + eb_ref[...]) * mij

    # fused neighbor gather: one-hot(edge_idx) @ resident node table (MXU)
    ids = idx_ref[...]                                            # (TE, 1) int32
    iota = lax.broadcasted_iota(jnp.int32, (TE, N), 1)
    onehot = (ids == iota).astype(jnp.float32)                    # (TE, N)
    nj = jnp.dot(onehot, tbl_ref[...], preferred_element_type=jnp.float32)  # (TE, Dn)

    # message MLP: node_i term once per node; [node_j || edge] one 64-deep matmul
    nhn = nhn_ref[...]                                            # (T, Dn)
    pre_i = jnp.dot(nhn, wi_ref[...], preferred_element_type=jnp.float32) + b1_ref[...]
    je = jnp.concatenate([nj, en], axis=-1)                       # (TE, Dn+De)
    z = jnp.dot(je, wje_ref[...], preferred_element_type=jnp.float32)       # (TE, Hm)
    z = z.reshape(T, K, Hm) + pre_i[:, None, :]                   # broadcast view add
    h = jnp.maximum(z, 0.0) * mij.reshape(T, K, 1)                # masked activations

    # K-sum before the (linear) W2 matmul: 8x fewer MXU rows, no (TE, Dn) temp
    hsum = jnp.sum(h, axis=1)                                     # (T, Hm)
    msum = jnp.sum(mij.reshape(T, K, 1), axis=1)                  # (T, 1)
    msg = (jnp.dot(hsum, w2_ref[...], preferred_element_type=jnp.float32)
           + b2_ref[...] * msum) * (1.0 / scale)                  # (T, Dn)

    # update MLP: [node_h_norm || message] against the unsplit (2*Dn)-deep W1
    u_in = jnp.concatenate([nhn, msg], axis=-1)                   # (T, 2*Dn)
    u = jnp.maximum(jnp.dot(u_in, u1_ref[...], preferred_element_type=jnp.float32)
                    + c1_ref[...], 0.0)
    upd = jnp.dot(u, u2_ref[...], preferred_element_type=jnp.float32) + c2_ref[...]

    # TODO(synk): node output last dim is 32 (<128) -> masked vst; 8x smaller
    # than the edge traffic, accepted.
    o_ref[...] = (nh_ref[...] + upd) * mi_ref[...]


# ----------------------------------------------------------------------------
# Kernel 3: edge update (fused edge-LN recompute, in-VMEM gather of updated
# nodes, edge MLP, residual, mask).
#   edge_out = (edge_h + MLP([node_i_out, node_j_out, edge_norm])) * mask_ij
# ----------------------------------------------------------------------------
def _edge_update_kernel(tbl_ref, ni_ref, eh_ref, idx_ref, mij_ref,
                        ew_ref, eb_ref,
                        wi_ref, wje_ref, b1_ref, w2_ref, b2_ref,
                        o_ref, *, K):
    TE, De = eh_ref.shape
    T = TE // K
    N, Dn = tbl_ref.shape
    He = wi_ref.shape[1]

    e = eh_ref[...]                                               # (TE, De)
    mu = jnp.mean(e, axis=-1, keepdims=True)
    var = jnp.mean(e * e, axis=-1, keepdims=True) - mu * mu
    mij = mij_ref[...]                                            # (TE, 1)
    en = ((e - mu) * lax.rsqrt(var + EPS) * ew_ref[...] + eb_ref[...]) * mij

    ids = idx_ref[...]                                            # (TE, 1) int32
    iota = lax.broadcasted_iota(jnp.int32, (TE, N), 1)
    onehot = (ids == iota).astype(jnp.float32)
    nj = jnp.dot(onehot, tbl_ref[...], preferred_element_type=jnp.float32)  # (TE, Dn)

    pre_i = jnp.dot(ni_ref[...], wi_ref[...], preferred_element_type=jnp.float32) + b1_ref[...]
    je = jnp.concatenate([nj, en], axis=-1)                       # (TE, Dn+De)
    z = jnp.dot(je, wje_ref[...], preferred_element_type=jnp.float32)       # (TE, He)
    z = z.reshape(T, K, He) + pre_i[:, None, :]
    h = jnp.maximum(z, 0.0).reshape(TE, He)
    upd = jnp.dot(h, w2_ref[...], preferred_element_type=jnp.float32) + b2_ref[...]
    # TODO(synk): lane-dense (T, K*De) store slab skipped (needs an in-kernel
    # lane<->sublane relayout); masked 32-lane vst accepted for now.
    o_ref[...] = (e + upd) * mij


# ----------------------------------------------------------------------------
# Wrapper = GraphLayer.forward
# ----------------------------------------------------------------------------
def graph_layer_forward(params, node_h, edge_h, edge_idx, mask_i, mask_ij, scale=1.0):
    B, N, Dn = node_h.shape
    K = edge_idx.shape[-1]
    De = edge_h.shape[-1]
    Hm = params['msg_W2'].shape[0]
    Hu = params['upd_W2'].shape[0]
    He = params['edge_W2'].shape[0]
    f32 = jnp.float32

    # Tiling: pad N so an 8-aligned node tile always divides (no full-extent
    # fallback), and guarantee >= 2 grid steps (v7x has 2 TensorCores).
    tile_n = _pick_node_tile(N, K)
    N_pad = _round_up(N, tile_n)
    if B * (N_pad // tile_n) < 2 and N_pad >= 16:
        tile_n = max(8, (N_pad // 2) // 8 * 8)
        N_pad = _round_up(N, tile_n)
    grid = (B, N_pad // tile_n)
    TE = tile_n * K
    pad = N_pad - N

    nh = node_h.astype(f32)
    eh = edge_h.astype(f32)
    idx = edge_idx.astype(jnp.int32)
    mi = (mask_i != 0).astype(f32)
    mij = (mask_ij != 0).astype(f32)
    if pad:
        nh = jnp.pad(nh, ((0, 0), (0, pad), (0, 0)))
        eh = jnp.pad(eh, ((0, 0), (0, pad), (0, 0), (0, 0)))
        idx = jnp.pad(idx, ((0, 0), (0, pad), (0, 0)))
        mi = jnp.pad(mi, ((0, 0), (0, pad)))
        mij = jnp.pad(mij, ((0, 0), (0, pad), (0, 0)))

    eh2 = eh.reshape(B, N_pad * K, De)            # edge rows, feature-last
    idx2 = idx.reshape(B, N_pad * K, 1)
    mij2 = mij.reshape(B, N_pad * K, 1)
    mi2 = mi.reshape(B, N_pad, 1)

    # weight packing: keep the node_i slice separate (computed once per node);
    # [node_j || edge] and [node || message] use the contiguous 64-deep slices.
    Wm_i, Wm_je = params['msg_W1'][:Dn], params['msg_W1'][Dn:]
    We_i, We_je = params['edge_W1'][:Dn], params['edge_W1'][Dn:]
    nnw = params['node_norm_w'].reshape(1, Dn)
    nnb = params['node_norm_b'].reshape(1, Dn)
    enw = params['edge_norm_w'].reshape(1, De)
    enb = params['edge_norm_b'].reshape(1, De)

    def tile(feat):                 # per-node tile
        return pl.BlockSpec((None, tile_n, feat), lambda b, i: (b, i, 0))

    def etile(feat):                # per-edge tile (tile_n * K rows)
        return pl.BlockSpec((None, TE, feat), lambda b, i: (b, i, 0))

    def table(feat):                # full per-batch table (VMEM-resident)
        return pl.BlockSpec((None, N_pad, feat), lambda b, i: (b, 0, 0))

    def rep(shape):                 # replicated weights / biases
        return pl.BlockSpec(shape, lambda b, i: (0,) * len(shape))

    cparams = pltpu.CompilerParams(
        dimension_semantics=("parallel", "parallel"),
        vmem_limit_bytes=VMEM_LIMIT)

    # --- Stage A: node MaskedNorm ('transformer') ----------------------------
    node_h_norm = pl.pallas_call(
        _node_norm_kernel,
        out_shape=jax.ShapeDtypeStruct((B, N_pad, Dn), f32),
        grid_spec=pltpu.PrefetchScalarGridSpec(
            num_scalar_prefetch=0, grid=grid,
            in_specs=[tile(Dn), tile(1), rep((1, Dn)), rep((1, Dn))],
            out_specs=tile(Dn)),
        compiler_params=cparams,
    )(nh, mi2, nnw, nnb)

    # --- node update ----------------------------------------------------------
    node_kernel = functools.partial(_node_update_kernel, K=K, scale=float(scale))
    node_h_out = pl.pallas_call(
        node_kernel,
        out_shape=jax.ShapeDtypeStruct((B, N_pad, Dn), f32),
        grid_spec=pltpu.PrefetchScalarGridSpec(
            num_scalar_prefetch=0, grid=grid,
            in_specs=[
                table(Dn),                   # normalized node table (gather source)
                tile(Dn),                    # normalized node tile (node_i)
                tile(Dn),                    # raw node tile (residual)
                etile(De),                   # edge features
                etile(1),                    # edge_idx
                tile(1),                     # mask_i
                etile(1),                    # mask_ij
                rep((1, De)), rep((1, De)),                # edge norm w, b
                rep((Dn, Hm)), rep((Dn + De, Hm)),         # msg W1: node_i | [node_j||edge]
                rep((1, Hm)), rep((Hm, Dn)), rep((1, Dn)),  # msg b1, W2, b2
                rep((2 * Dn, Hu)), rep((1, Hu)),           # upd W1 (merged), b1
                rep((Hu, Dn)), rep((1, Dn)),               # upd W2, b2
            ],
            out_specs=tile(Dn)),
        compiler_params=cparams,
    )(node_h_norm, node_h_norm, nh, eh2, idx2, mi2, mij2,
      enw, enb,
      Wm_i, Wm_je, params['msg_b1'].reshape(1, Hm),
      params['msg_W2'], params['msg_b2'].reshape(1, Dn),
      params['upd_W1'], params['upd_b1'].reshape(1, Hu),
      params['upd_W2'], params['upd_b2'].reshape(1, Dn))

    # --- edge update (packed with *updated* nodes, like the reference) -------
    edge_kernel = functools.partial(_edge_update_kernel, K=K)
    edge_h_out = pl.pallas_call(
        edge_kernel,
        out_shape=jax.ShapeDtypeStruct((B, N_pad * K, De), f32),
        grid_spec=pltpu.PrefetchScalarGridSpec(
            num_scalar_prefetch=0, grid=grid,
            in_specs=[
                table(Dn),                   # updated node table (gather source)
                tile(Dn),                    # updated node tile (node_i)
                etile(De),                   # edge features (LN recompute + residual)
                etile(1),                    # edge_idx
                etile(1),                    # mask_ij
                rep((1, De)), rep((1, De)),                # edge norm w, b
                rep((Dn, He)), rep((Dn + De, He)),         # edge W1: node_i | [node_j||edge]
                rep((1, He)), rep((He, De)), rep((1, De)),  # edge b1, W2, b2
            ],
            out_specs=etile(De)),
        compiler_params=cparams,
    )(node_h_out, node_h_out, eh2, idx2, mij2,
      enw, enb,
      We_i, We_je, params['edge_b1'].reshape(1, He),
      params['edge_W2'], params['edge_b2'].reshape(1, De))

    node_out = node_h_out[:, :N, :]
    edge_out = edge_h_out.reshape(B, N_pad, K, De)[:, :N]
    return node_out, edge_out


# ----------------------------------------------------------------------------
# Pure-JAX reference (mirrors the PyTorch forward exactly) for verification
# ----------------------------------------------------------------------------
def graph_layer_ref(params, node_h, edge_h, edge_idx, mask_i, mask_ij, scale=1.0):
    B, N, Dn = node_h.shape
    K = edge_idx.shape[-1]

    def ln(x, mask, w, b):
        mean = x.mean(-1, keepdims=True)
        std = jnp.sqrt(((x - mean) ** 2).mean(-1, keepdims=True) + EPS)
        y = (x - mean) / std * w + b
        return y * (mask != 0).astype(x.dtype)[..., None]

    def mlp(x, W1, b1, W2, b2):
        return jnp.maximum(x @ W1 + b1, 0.0) @ W2 + b2

    def pack(nodes, edges):
        node_i = jnp.broadcast_to(nodes[:, :, None, :], (B, N, K, Dn))
        node_j = jnp.take_along_axis(
            nodes, edge_idx.reshape(B, N * K, 1), axis=1).reshape(B, N, K, Dn)
        return jnp.concatenate([node_i, node_j, edges], axis=-1)

    nn_ = ln(node_h, mask_i, params['node_norm_w'], params['node_norm_b'])
    en_ = ln(edge_h, mask_ij, params['edge_norm_w'], params['edge_norm_b'])
    mi = (mask_i != 0).astype(node_h.dtype)
    mij = (mask_ij != 0).astype(node_h.dtype)

    msgs = mlp(pack(nn_, en_), params['msg_W1'], params['msg_b1'],
               params['msg_W2'], params['msg_b2']) * mij[..., None]
    message = msgs.sum(2) / scale
    node_stack = jnp.concatenate([nn_, message], -1)
    node_out = (node_h + mlp(node_stack, params['upd_W1'], params['upd_b1'],
                             params['upd_W2'], params['upd_b2'])) * mi[..., None]
    edge_out = (edge_h + mlp(pack(node_out, en_), params['edge_W1'], params['edge_b1'],
                             params['edge_W2'], params['edge_b2'])) * mij[..., None]
    return node_out, edge_out


# ----------------------------------------------------------------------------
def init_params(key, dim_nodes, dim_edges):
    F1 = 2 * dim_nodes + dim_edges
    Hm = dim_nodes   # message_mlp hidden defaults to dim_out
    Hu = dim_nodes   # update_mlp hidden defaults to dim_out
    He = dim_edges   # edge_mlp hidden defaults to dim_out
    keys = jax.random.split(key, 16)

    def lin(kw, kb, fan_in, fan_out):
        bound = 1.0 / np.sqrt(fan_in)
        W = jax.random.uniform(kw, (fan_in, fan_out), jnp.float32, -bound, bound)
        b = jax.random.uniform(kb, (fan_out,), jnp.float32, -bound, bound)
        return W, b

    p = {}
    p['node_norm_w'] = jax.random.uniform(keys[0], (dim_nodes,), jnp.float32)
    p['node_norm_b'] = jnp.zeros((dim_nodes,), jnp.float32)
    p['edge_norm_w'] = jax.random.uniform(keys[1], (dim_edges,), jnp.float32)
    p['edge_norm_b'] = jnp.zeros((dim_edges,), jnp.float32)
    p['msg_W1'], p['msg_b1'] = lin(keys[2], keys[3], F1, Hm)
    p['msg_W2'], p['msg_b2'] = lin(keys[4], keys[5], Hm, dim_nodes)
    p['upd_W1'], p['upd_b1'] = lin(keys[6], keys[7], 2 * dim_nodes, Hu)
    p['upd_W2'], p['upd_b2'] = lin(keys[8], keys[9], Hu, dim_nodes)
    p['edge_W1'], p['edge_b1'] = lin(keys[10], keys[11], F1, He)
    p['edge_W2'], p['edge_b2'] = lin(keys[12], keys[13], He, dim_edges)
    return p


if __name__ == "__main__":
    B, N, K = 2, 16, 8
    dim_nodes, dim_edges = 32, 32

    key = jax.random.PRNGKey(0)
    k1, k2, k3, k4, k5, kp = jax.random.split(key, 6)

    node_h = jax.random.normal(k1, (B, N, dim_nodes), jnp.float32)
    edge_h = jax.random.normal(k2, (B, N, K, dim_edges), jnp.float32)
    edge_idx = jax.random.randint(k3, (B, N, K), 0, N, jnp.int32)
    mask_i = (jax.random.uniform(k4, (B, N)) > 0.2).astype(jnp.float32)
    mask_ij = (jax.random.uniform(k5, (B, N, K)) > 0.2).astype(jnp.float32) \
        * mask_i[..., None]

    params = init_params(kp, dim_nodes, dim_edges)

    node_out, edge_out = graph_layer_forward(
        params, node_h, edge_h, edge_idx, mask_i, mask_ij, scale=1.0)
    jax.block_until_ready((node_out, edge_out))

    node_ref, edge_ref = graph_layer_ref(
        params, node_h, edge_h, edge_idx, mask_i, mask_ij, scale=1.0)

    np.testing.assert_allclose(np.asarray(node_out), np.asarray(node_ref),
                               rtol=1e-3, atol=1e-3)
    np.testing.assert_allclose(np.asarray(edge_out), np.asarray(edge_ref),
                               rtol=1e-3, atol=1e-3)
    print("KERNEL_OK")
</pallas_src>

<mosaic_0001>
module attributes {stable_mosaic.version = 11 : i64} {
  func.func @_node_norm_kernel(%arg0: i32, %arg1: i32, %arg2: memref<1x16x32xf32, #tpu.memory_space<vmem>>, %arg3: memref<1x16x1xf32, #tpu.memory_space<vmem>>, %arg4: memref<1x32xf32, #tpu.memory_space<vmem>>, %arg5: memref<1x32xf32, #tpu.memory_space<vmem>>, %arg6: memref<1x16x32xf32, #tpu.memory_space<vmem>>) attributes {dimension_semantics = [#tpu.dimension_semantics<parallel>, #tpu.dimension_semantics<parallel>], iteration_bounds = array<i64: 2, 1>, scalar_prefetch = 0 : i64, scratch_operands = 0 : i64, tpu.core_type = #tpu.core_type<tc>, window_params = [{transform_indices = @transform_0, window_bounds = array<i64: 1, 16, 32>}, {transform_indices = @transform_1, window_bounds = array<i64: 1, 16, 1>}, {pipeline_mode = #tpu.pipeline_mode<synchronous>, transform_indices = @transform_2, window_bounds = array<i64: 1, 32>}, {pipeline_mode = #tpu.pipeline_mode<synchronous>, transform_indices = @transform_3, window_bounds = array<i64: 1, 32>}, {transform_indices = @transform_4, window_bounds = array<i64: 1, 16, 32>}]} {
    %c0 = arith.constant 0 : index
    %c0_0 = arith.constant 0 : index
    %c0_1 = arith.constant 0 : index
    %0 = vector.load %arg2[%c0, %c0_0, %c0_1] : memref<1x16x32xf32, #tpu.memory_space<vmem>>, vector<1x16x32xf32>
    %1 = vector.shape_cast %0 : vector<1x16x32xf32> to vector<16x32xf32>
    %cst = arith.constant dense<0.000000e+00> : vector<16xf32>
    %2 = vector.multi_reduction <add>, %1, %cst [1] : vector<16x32xf32> to vector<16xf32>
    %3 = vector.shape_cast %2 : vector<16xf32> to vector<16x1xf32>
    %cst_2 = arith.constant 3.200000e+01 : f32
    %4 = vector.broadcast %cst_2 : f32 to vector<16x1xf32>
    %5 = arith.divf %3, %4 : vector<16x1xf32>
    %6 = arith.mulf %1, %1 : vector<16x32xf32>
    %cst_3 = arith.constant dense<0.000000e+00> : vector<16xf32>
    %7 = vector.multi_reduction <add>, %6, %cst_3 [1] : vector<16x32xf32> to vector<16xf32>
    %8 = vector.shape_cast %7 : vector<16xf32> to vector<16x1xf32>
    %cst_4 = arith.constant 3.200000e+01 : f32
    %9 = vector.broadcast %cst_4 : f32 to vector<16x1xf32>
    %10 = arith.divf %8, %9 : vector<16x1xf32>
    %11 = arith.mulf %5, %5 : vector<16x1xf32>
    %12 = arith.subf %10, %11 : vector<16x1xf32>
    %13 = vector.broadcast %5 : vector<16x1xf32> to vector<16x32xf32>
    %14 = arith.subf %1, %13 : vector<16x32xf32>
    %cst_5 = arith.constant 9.99999974E-6 : f32
    %15 = vector.broadcast %cst_5 : f32 to vector<16x1xf32>
    %16 = arith.addf %12, %15 : vector<16x1xf32>
    %17 = math.rsqrt %16 : vector<16x1xf32>
    %18 = vector.broadcast %17 : vector<16x1xf32> to vector<16x32xf32>
    %19 = arith.mulf %14, %18 : vector<16x32xf32>
    %c0_6 = arith.constant 0 : index
    %c0_7 = arith.constant 0 : index
    %20 = vector.load %arg4[%c0_6, %c0_7] : memref<1x32xf32, #tpu.memory_space<vmem>>, vector<1x32xf32>
    %21 = vector.broadcast %20 : vector<1x32xf32> to vector<16x32xf32>
    %22 = arith.mulf %19, %21 : vector<16x32xf32>
    %c0_8 = arith.constant 0 : index
    %c0_9 = arith.constant 0 : index
    %23 = vector.load %arg5[%c0_8, %c0_9] : memref<1x32xf32, #tpu.memory_space<vmem>>, vector<1x32xf32>
    %24 = vector.broadcast %23 : vector<1x32xf32> to vector<16x32xf32>
    %25 = arith.addf %22, %24 : vector<16x32xf32>
    %c0_10 = arith.constant 0 : index
    %c0_11 = arith.constant 0 : index
    %c0_12 = arith.constant 0 : index
    %26 = vector.load %arg3[%c0_10, %c0_11, %c0_12] : memref<1x16x1xf32, #tpu.memory_space<vmem>>, vector<1x16x1xf32>
    %27 = vector.shape_cast %26 : vector<1x16x1xf32> to vector<16x1xf32>
    %28 = vector.broadcast %27 : vector<16x1xf32> to vector<16x32xf32>
    %29 = arith.mulf %25, %28 : vector<16x32xf32>
    %c0_13 = arith.constant 0 : index
    %c0_14 = arith.constant 0 : index
    %c0_15 = arith.constant 0 : index
    %30 = vector.load %arg6[%c0_13, %c0_14, %c0_15] : memref<1x16x32xf32, #tpu.memory_space<vmem>>, vector<1x16x32xf32>
    %31 = vector.shape_cast %30 : vector<1x16x32xf32> to vector<16x32xf32>
    %32 = vector.shape_cast %29 : vector<16x32xf32> to vector<1x16x32xf32>
    tpu.vector_store %arg6[%c0_13, %c0_14, %c0_15], %32 {strides = array<i32>} : memref<1x16x32xf32, #tpu.memory_space<vmem>>, vector<1x16x32xf32>,
    return
  }
  func.func @transform_0(%arg0: i32, %arg1: i32) -> (i32, i32, i32) {
    %c0_i32 = arith.constant 0 : i32
    %c0_i32_0 = arith.constant 0 : i32
    return %arg0, %arg1, %c0_i32 : i32, i32, i32
  }
  func.func @transform_1(%arg0: i32, %arg1: i32) -> (i32, i32, i32) {
    %c0_i32 = arith.constant 0 : i32
    %c0_i32_0 = arith.constant 0 : i32
    return %arg0, %arg1, %c0_i32 : i32, i32, i32
  }
  func.func @transform_2(%arg0: i32, %arg1: i32) -> (i32, i32) {
    %c0_i32 = arith.constant 0 : i32
    %c0_i32_0 = arith.constant 0 : i32
    %c0_i32_1 = arith.constant 0 : i32
    return %c0_i32, %c0_i32_0 : i32, i32
  }
  func.func @transform_3(%arg0: i32, %arg1: i32) -> (i32, i32) {
    %c0_i32 = arith.constant 0 : i32
    %c0_i32_0 = arith.constant 0 : i32
    %c0_i32_1 = arith.constant 0 : i32
    return %c0_i32, %c0_i32_0 : i32, i32
  }
  func.func @transform_4(%arg0: i32, %arg1: i32) -> (i32, i32, i32) {
    %c0_i32 = arith.constant 0 : i32
    %c0_i32_0 = arith.constant 0 : i32
    return %arg0, %arg1, %c0_i32 : i32, i32, i32
  }
}

</mosaic_0001>

<llo_original>
// kernel: tpu_custom_call.1
$region0: #{tpu_custom_call.1}
  #allocation0 [shape = 'u32[]', space=smem, size = 0x4, offset = 0x4, fixed_abs, tag = 'smem constant byte address 0x4 - core index']
  #allocation1 [shape = 'u32[144,128]{1,0:T(1,128)}', space=vmem, size = 0x12000, scoped, tag = 'internal scratch']
  %s0 = inlined_call_operand.vmem [shape: f32[2,16,32], index: 0, kind: input, shape index: {}]
  %s1 = inlined_call_operand.vmem [shape: f32[2,16,1], index: 1, kind: input, shape index: {}]
  %s2 = inlined_call_operand.vmem [shape: f32[1,32], index: 2, kind: input, shape index: {}]
  %s3 = inlined_call_operand.vmem [shape: f32[1,32], index: 3, kind: input, shape index: {}]
  %s4 = inlined_call_operand.hbm [shape: f32[2,16,32], index: 4, kind: output, shape index: {}]
  %s5 = sld [smem:[#allocation0]]
  $region49: #{tpu_custom_call.1} parent=0
    _
  %s7 = ssub.s32 1, %s5
  %s8 = scalar_select 0, %s7, %s5
  $region1: #{tpu_custom_call.1} parent=0
    #allocation2 [shape = 'u8[16384]{0}', space=vmem, size = 0x4000, scoped, tag = 'output window, operand 0']
    #allocation3 [shape = 's32[2]{0}', space=sflag, size = 0x8, scoped, tag = 'scoped memory for tpu_custom_call.1']
    %9 = vsyncpa [#allocation3], 0
    %s10 = scalar_lea.sflag [#allocation3], 1
    %11 = vsyncpa %s10, 0
    loop: start=0, step=1, limit=4
    $region2: #{tpu_custom_call.1} parent=1 // loop_pre_header
      _
    $region3: #{tpu_custom_call.1} parent=1 // loop_header
      %s13 = sphi 0, %s17
      %p14 = scmp.ge.s32.totalorder %s13, 4
      %s20 = sphi 0, %s32
      %s21 = sphi 0, %s28
      %s22 = sphi 0, %s20
      %s23 = sphi 0, %s21
      %s24 = sphi 0, %s22
      %s25 = sphi 0, %s23
      %s37 = sphi 0, %s39
      %s40 = sphi 0, %s37
      %s41 = sphi 0, %s40
      %s57 = sphi 0, %s41
      %s65 = sphi 0, %s67
      %s68 = sphi 0, %s65
      %s69 = sphi 0, %s68
      %s85 = sphi 0, %s69
      %s89 = sphi 0, %s89
      %s91 = sphi 0, %s89
      %s92 = sphi 0, %s91
      %s106 = sphi 0, %s92
      %s110 = sphi 0, %s110
      %s112 = sphi 0, %s110
      %s113 = sphi 0, %s112
      %s127 = sphi 0, %s113
      %s135 = sphi 0, %s137
      %s138 = sphi 0, %s135
      %s139 = sphi 0, %s138
      %s155 = sphi 0, %s139
    $region4: #{tpu_custom_call.1} parent=1 // loop_header_branch
      %16 = sbr.rel (%p14) target = $region8
    $region5: #{tpu_custom_call.1} parent=1 // loop_body
      %s18 = ssub.s32 %s13, 1
      %s19 = ssub.s32 %s13, 2
      %s26 = sadd.s32 1, %s21
      %p27 = scmp.ge.s32.totalorder %s26, 1
      %s28 = scalar_select %p27, 0, %s26
      %s29 = sadd.s32 1, %s20
      %s30 = scalar_select %p27, %s29, %s20
      %p31 = scmp.ge.s32.totalorder %s30, 2
      %s32 = scalar_select %p31, 0, %s30
      %s33 = ssub.s32 %s20, %s32
      %s34 = ssub.s32 %s21, %s28
      %s35 = sor.u32 %s33, %s34
      %p36 = scmp.eq.s32.totalorder %s35, 0
      %s38 = sadd.s32 %s37, 1
      %s39 = scalar_select %p36, %s37, %s38
      %p42 = pneg %p36
      %p43 = scmp.eq.s32.totalorder %s13, 1
      %p44 = por %p42, %p43
      %p45 = scmp.ne.s32.totalorder %s37, %s40
      %p46 = scmp.eq.s32.totalorder %s13, 0
      %p47 = por %p45, %p46
      %p48 = scmp.ne.s32.totalorder %s37, %s40
      %p49 = scmp.eq.s32.totalorder %s18, 1
      %p50 = por %p48, %p49
      %p51 = scmp.ne.s32.totalorder %s40, %s41
      %p52 = scmp.eq.s32.totalorder %s18, 0
      %p53 = por %p51, %p52
      %p54 = scmp.ne.s32.totalorder %s40, %s41
      %p55 = scmp.eq.s32.totalorder %s19, 1
      %p56 = por %p54, %p55
      %p58 = scmp.ne.s32.totalorder %s41, %s57
      %p59 = scmp.eq.s32.totalorder %s19, 0
      %p60 = por %p58, %p59
      %s61 = ssub.s32 %s20, %s32
      %s62 = ssub.s32 %s21, %s28
      %s63 = sor.u32 %s61, %s62
      %p64 = scmp.eq.s32.totalorder %s63, 0
      %s66 = sadd.s32 %s65, 1
      %s67 = scalar_select %p64, %s65, %s66
      %p70 = pneg %p64
      %p71 = scmp.eq.s32.totalorder %s13, 1
      %p72 = por %p70, %p71
      %p73 = scmp.ne.s32.totalorder %s65, %s68
      %p74 = scmp.eq.s32.totalorder %s13, 0
      %p75 = por %p73, %p74
      %p76 = scmp.ne.s32.totalorder %s65, %s68
      %p77 = scmp.eq.s32.totalorder %s18, 1
      %p78 = por %p76, %p77
      %p79 = scmp.ne.s32.totalorder %s68, %s69
      %p80 = scmp.eq.s32.totalorder %s18, 0
      %p81 = por %p79, %p80
      %p82 = scmp.ne.s32.totalorder %s68, %s69
      %p83 = scmp.eq.s32.totalorder %s19, 1
      %p84 = por %p82, %p83
      %p86 = scmp.ne.s32.totalorder %s69, %s85
      %p87 = scmp.eq.s32.totalorder %s19, 0
      %p88 = por %p86, %p87
      %s90 = sadd.s32 %s89, 1
      %p93 = scmp.eq.s32.totalorder %s13, 1
      %p94 = scmp.ne.s32.totalorder %s89, %s91
      %p95 = scmp.eq.s32.totalorder %s13, 0
      %p96 = por %p94, %p95
      %p97 = scmp.ne.s32.totalorder %s89, %s91
      %p98 = scmp.eq.s32.totalorder %s18, 1
      %p99 = por %p97, %p98
      %p100 = scmp.ne.s32.totalorder %s91, %s92
      %p101 = scmp.eq.s32.totalorder %s18, 0
      %p102 = por %p100, %p101
      %p103 = scmp.ne.s32.totalorder %s91, %s92
      %p104 = scmp.eq.s32.totalorder %s19, 1
      %p105 = por %p103, %p104
      %p107 = scmp.ne.s32.totalorder %s92, %s106
      %p108 = scmp.eq.s32.totalorder %s19, 0
      %p109 = por %p107, %p108
      %s111 = sadd.s32 %s110, 1
      %p114 = scmp.eq.s32.totalorder %s13, 1
      %p115 = scmp.ne.s32.totalorder %s110, %s112
      %p116 = scmp.eq.s32.totalorder %s13, 0
      %p117 = por %p115, %p116
      %p118 = scmp.ne.s32.totalorder %s110, %s112
      %p119 = scmp.eq.s32.totalorder %s18, 1
      %p120 = por %p118, %p119
      %p121 = scmp.ne.s32.totalorder %s112, %s113
      %p122 = scmp.eq.s32.totalorder %s18, 0
      %p123 = por %p121, %p122
      %p124 = scmp.ne.s32.totalorder %s112, %s113
      %p125 = scmp.eq.s32.totalorder %s19, 1
      %p126 = por %p124, %p125
      %p128 = scmp.ne.s32.totalorder %s113, %s127
      %p129 = scmp.eq.s32.totalorder %s19, 0
      %p130 = por %p128, %p129
      %s131 = ssub.s32 %s20, %s32
      %s132 = ssub.s32 %s21, %s28
      %s133 = sor.u32 %s131, %s132
      %p134 = scmp.eq.s32.totalorder %s133, 0
      %s136 = sadd.s32 %s135, 1
      %s137 = scalar_select %p134, %s135, %s136
      %p140 = pneg %p134
      %p141 = scmp.eq.s32.totalorder %s13, 1
      %p142 = por %p140, %p141
      %p143 = scmp.ne.s32.totalorder %s135, %s138
      %p144 = scmp.eq.s32.totalorder %s13, 0
      %p145 = por %p143, %p144
      %p146 = scmp.ne.s32.totalorder %s135, %s138
      %p147 = scmp.eq.s32.totalorder %s18, 1
      %p148 = por %p146, %p147
      %p149 = scmp.ne.s32.totalorder %s138, %s139
      %p150 = scmp.eq.s32.totalorder %s18, 0
      %p151 = por %p149, %p150
      %p152 = scmp.ne.s32.totalorder %s138, %s139
      %p153 = scmp.eq.s32.totalorder %s19, 1
      %p154 = por %p152, %p153
      %p156 = scmp.ne.s32.totalorder %s139, %s155
      %p157 = scmp.eq.s32.totalorder %s19, 0
      %p158 = por %p156, %p157
      %p159 = scmp.le.s32.totalorder 1, %s13
      %p160 = scmp.lt.s32.totalorder %s13, 3
      %p161 = pnand %p159, %p160
      %p162 = pneg %p161
      // Predicated region
      $region9: #{tpu_custom_call.1} parent=5 // pred_check
        _
      $region10: #{tpu_custom_call.1} parent=5 // pred_check_branch
        %164 = sbr.rel (%p161) target = $region12
      $region11: #{tpu_custom_call.1} parent=5 // pred_region
        %s165 = ssub.s32 %s13, 1
        // Predicated region
        $region13: #{tpu_custom_call.1} parent=11 // pred_check
          %p166 = pneg %p102
        $region14: #{tpu_custom_call.1} parent=11 // pred_check_branch
          %168 = sbr.rel (%p166) target = $region16
        $region15: #{tpu_custom_call.1} parent=11 // pred_region
          _
        $region16: #{tpu_custom_call.1} parent=11 // pred_fallthru
          _
        // Predicated region
        $region17: #{tpu_custom_call.1} parent=11 // pred_check
          %p169 = pneg %p123
        $region18: #{tpu_custom_call.1} parent=11 // pred_check_branch
          %171 = sbr.rel (%p169) target = $region20
        $region19: #{tpu_custom_call.1} parent=11 // pred_region
          _
        $region20: #{tpu_custom_call.1} parent=11 // pred_fallthru
          _
      $region12: #{tpu_custom_call.1} parent=5 // pred_fallthru
        _
      %p172 = scmp.lt.s32.totalorder %s13, 2
      // Predicated region
      $region21: #{tpu_custom_call.1} parent=5 // pred_check
        %p173 = pneg %p172
      $region22: #{tpu_custom_call.1} parent=5 // pred_check_branch
        %175 = sbr.rel (%p173) target = $region24
      $region23: #{tpu_custom_call.1} parent=5 // pred_region
        // Predicated region
        $region25: #{tpu_custom_call.1} parent=23 // pred_check
          %p176 = pneg %p47
        $region26: #{tpu_custom_call.1} parent=23 // pred_check_branch
          %178 = sbr.rel (%p176) target = $region28
        $region27: #{tpu_custom_call.1} parent=23 // pred_region
          %s179 = smul.u32 2, %s21
          %p180 = scmp.lt.s32.totalorder %s20, 1
          %s181 = scalar_select %p180, %s20, 1
          %p182 = scmp.lt.s32.totalorder %s179, 1
          %s183 = scalar_select %p182, %s179, 1
          %s184 = smul.addr %s181, 2
          %s185 = sadd.s32 %s183, %s184
          %s186 = smul.addr %s185, 8
          %s187 = scalar_lea.vmem %s0, %s186
          %s188 = smul.u32 2, %s21
        $region28: #{tpu_custom_call.1} parent=23 // pred_fallthru
          _
        // Predicated region
        $region29: #{tpu_custom_call.1} parent=23 // pred_check
          %p189 = pneg %p75
        $region30: #{tpu_custom_call.1} parent=23 // pred_check_branch
          %191 = sbr.rel (%p189) target = $region32
        $region31: #{tpu_custom_call.1} parent=23 // pred_region
          %s192 = smul.u32 2, %s21
          %p193 = scmp.lt.s32.totalorder %s20, 1
          %s194 = scalar_select %p193, %s20, 1
          %p195 = scmp.lt.s32.totalorder %s192, 1
          %s196 = scalar_select %p195, %s192, 1
          %s197 = smul.addr %s194, 2
          %s198 = sadd.s32 %s196, %s197
          %s199 = smul.addr %s198, 8
          %s200 = scalar_lea.vmem %s1, %s199
          %s201 = smul.u32 2, %s21
        $region32: #{tpu_custom_call.1} parent=23 // pred_fallthru
          _
      $region24: #{tpu_custom_call.1} parent=5 // pred_fallthru
        _
      %p202 = scmp.le.s32.totalorder 1, %s13
      %p203 = scmp.lt.s32.totalorder %s13, 3
      %p204 = pnand %p202, %p203
      %p205 = pneg %p204
      // Predicated region
      $region33: #{tpu_custom_call.1} parent=5 // pred_check
        _
      $region34: #{tpu_custom_call.1} parent=5 // pred_check_branch
        %207 = sbr.rel (%p204) target = $region36
      $region35: #{tpu_custom_call.1} parent=5 // pred_region
        %s208 = ssub.s32 %s13, 1
        %s209 = smul.u32 2, %s23
        %p210 = scmp.lt.s32.totalorder %s22, 1
        %s211 = scalar_select %p210, %s22, 1
        %p212 = scmp.lt.s32.totalorder %s209, 1
        %s213 = scalar_select %p212, %s209, 1
        %s214 = smul.addr %s211, 2
        %s215 = sadd.s32 %s213, %s214
        %s216 = smul.addr %s215, 8
        %s217 = scalar_lea.vmem %s0, %s216
        %p218 = pneg %p53
        %p219 = pneg %p50
        %s220 = smul.u32 2, %s23
        %p221 = scmp.lt.s32.totalorder %s22, 1
        %s222 = scalar_select %p221, %s22, 1
        %p223 = scmp.lt.s32.totalorder %s220, 1
        %s224 = scalar_select %p223, %s220, 1
        %s225 = smul.addr %s222, 2
        %s226 = sadd.s32 %s224, %s225
        %s227 = smul.addr %s226, 8
        %s228 = scalar_lea.vmem %s1, %s227
        %p229 = pneg %p81
        %p230 = pneg %p78
        %p231 = pneg %p102
        %p232 = pneg %p99
        %p233 = pneg %p123
        %p234 = pneg %p120
        %p235 = pneg %p151
        %p236 = pneg %p148
        %s237 = sand.u32 %s138, 1
        %s238 = scalar_lea.sflag [#allocation3], %s237
        %s239 = sand.u32 %s138, 1
        %s240 = smul.addr %s239, 16
        %s241 = scalar_lea.vmem [#allocation2], %s240
        %s242 = smul.u32 2, %s23
        %p243 = scmp.lt.s32.totalorder %s22, 1
        %s244 = scalar_select %p243, %s22, 1
        %p245 = scmp.lt.s32.totalorder %s242, 1
        %s246 = scalar_select %p245, %s242, 1
        %s247 = smul.addr %s244, 2
        %s248 = sadd.s32 %s246, %s247
        %s249 = smul.addr %s248, 8
        %s250 = scalar_lea.vmem %s0, %s249
        %s251 = smul.u32 2, %s23
        %s252 = smul.u32 2, %s23
        %p253 = scmp.lt.s32.totalorder %s22, 1
        %s254 = scalar_select %p253, %s22, 1
        %p255 = scmp.lt.s32.totalorder %s252, 1
        %s256 = scalar_select %p255, %s252, 1
        %s257 = smul.addr %s254, 2
        %s258 = sadd.s32 %s256, %s257
        %s259 = smul.addr %s258, 8
        %s260 = scalar_lea.vmem %s1, %s259
        %s261 = smul.u32 2, %s23
        %s262 = smul.u32 2, %s23
        %v263 = vld [vmem:[%s250] sm:$0xff]
        %v264 = vld [vmem:[%s250 + $0x8] sm:$0xff]
        %vm265 = vcmask 261120
        %v266 = vsel %vm265, %v263, 0.0
        %267 = vadd.xlane.f32.xlu0 %v266
        %v268 = vpop.xlane.xlu0 %267
        %v269 = vsel %vm265, %v264, 0.0
        %270 = vadd.xlane.f32.xlu0 %v269
        %v271 = vpop.xlane.xlu0 %270
        %v272 = vrcp.pop 32.0
        %v273 = vmul.f32 %v268, %v272
        %v274 = vmul.f32 %v271, %v272
        %v275 = vmul.f32 %v263, %v263
        %v276 = vmul.f32 %v264, %v264
        %v277 = vsel %vm265, %v275, 0.0
        %278 = vadd.xlane.f32.xlu0 %v277
        %v279 = vpop.xlane.xlu0 %278
        %v280 = vsel %vm265, %v276, 0.0
        %281 = vadd.xlane.f32.xlu0 %v280
        %v282 = vpop.xlane.xlu0 %281
        %v283 = vmul.f32 %v279, %v272
        %v284 = vmul.f32 %v282, %v272
        %v285 = vmul.f32 %v273, %v273
        %v286 = vmul.f32 %v274, %v274
        %v287 = vsub.f32 %v283, %v285
        %v288 = vsub.f32 %v284, %v286
        %v289 = vsub.f32 %v263, %v273
        %v290 = vsub.f32 %v264, %v274
        %v291 = vadd.f32 %v287, 1e-05
        %v292 = vadd.f32 %v288, 1e-05
        %v293 = vrsqrt.pop %v291
        %v294 = vrsqrt.pop %v292
        %v295 = vmul.f32 %v289, %v293
        %v296 = vmul.f32 %v290, %v294
        %v297 = vld [vmem:[%s2] sm:$0x1]
        %v299 = vlaneseq
        %v300 = vshrl.u32 %v299, 7
        %v301 = vsub.s32 0, %v300
        %v302 = vrot.slane %v297, %v301
        %v304 = vmul.f32 %v295, %v302
        %v305 = vmul.f32 %v296, %v302
        %v306 = vld [vmem:[%s3] sm:$0x1]
        %v308 = vlaneseq
        %v309 = vshrl.u32 %v308, 7
        %v310 = vsub.s32 0, %v309
        %v311 = vrot.slane %v306, %v310
        %v313 = vadd.f32 %v304, %v311
        %v314 = vadd.f32 %v305, %v311
        %v315 = vld [vmem:[%s260] sm:$0xff]
        %v316 = vld [vmem:[%s260 + $0x8] sm:$0xff]
        %318 = vset.pattern.permute.xlu0 0
        %319 = vperm.xlu0 %318, %v315
        %v320 = vpop.permute.xlu0 %319
        %323 = vset.pattern.permute.xlu0 0
        %324 = vperm.xlu0 %323, %v316
        %v325 = vpop.permute.xlu0 %324
        %v327 = vmul.f32 %v313, %v320
        %v328 = vmul.f32 %v314, %v325
        %329 = vst.msk [vmem:[%s241] sm:$0xff] %vm265, %v327
        %330 = vst.msk [vmem:[%s241 + $0x8] sm:$0xff] %vm265, %v328
        %s331 = sand.u32 %s138, 1
        %s332 = scalar_lea.sflag [#allocation3], %s331
        %s333 = sand.u32 %s138, 1
        %s334 = smul.addr %s333, 16
        %s335 = scalar_lea.vmem [#allocation2], %s334
        // Predicated region
        $region37: #{tpu_custom_call.1} parent=35 // pred_check
          %p336 = pneg %p148
        $region38: #{tpu_custom_call.1} parent=35 // pred_check_branch
          %338 = sbr.rel (%p336) target = $region40
        $region39: #{tpu_custom_call.1} parent=35 // pred_region
          %s339 = smul.u32 2, %s23
          %s341 = ssub.s32 256, 256
          %342 = vsyncadd %s332, %s341
          %s343 = smul.addr %s22, 2
          %s344 = sadd.s32 %s339, %s343
          %s345 = smul.addr %s344, 128
          %s346 = scalar_lea.hbm %s4, %s345
          %s347 = sshll.u32 %s335, 4
          %s348 = int_to_ptr.vmem [resolvable:$true] %s347
          %353 = dma.vmem_to_hbm [thread:$0]  %s348, 256, %s346, %s332, 128, 128, 8
        $region40: #{tpu_custom_call.1} parent=35 // pred_fallthru
          _
      $region36: #{tpu_custom_call.1} parent=5 // pred_fallthru
        _
      %p354 = scmp.le.s32.totalorder 2, %s13
      // Predicated region
      $region41: #{tpu_custom_call.1} parent=5 // pred_check
        %p355 = pneg %p354
      $region42: #{tpu_custom_call.1} parent=5 // pred_check_branch
        %357 = sbr.rel (%p355) target = $region44
      $region43: #{tpu_custom_call.1} parent=5 // pred_region
        %s358 = ssub.s32 %s13, 2
        // Predicated region
        $region45: #{tpu_custom_call.1} parent=43 // pred_check
          %p359 = pneg %p154
        $region46: #{tpu_custom_call.1} parent=43 // pred_check_branch
          %361 = sbr.rel (%p359) target = $region48
        $region47: #{tpu_custom_call.1} parent=43 // pred_region
          %s362 = sand.u32 %s139, 1
          %s363 = scalar_lea.sflag [#allocation3], %s362
          %s364 = sand.u32 %s139, 1
          %s365 = smul.addr %s364, 16
          %s366 = scalar_lea.vmem [#allocation2], %s365
          %367 = dma.done %s363, 256
        $region48: #{tpu_custom_call.1} parent=43 // pred_fallthru
          _
      $region44: #{tpu_custom_call.1} parent=5 // pred_fallthru
        _
    $region6: #{tpu_custom_call.1} parent=1 // loop_footer
      %s17 = sadd.s32 1, %s13
    $region7: #{tpu_custom_call.1} parent=1 // loop_footer_branch
      %12 = sbr.rel target = $region3
    $region8: #{tpu_custom_call.1} parent=1 // loop_exit
      _
    %368 = vsyncpa [#allocation3], 1
    %s369 = scalar_lea.sflag [#allocation3], 1
    %370 = vsyncpa %s369, 1

</llo_original>
